<compile_context>
chip_gen: v6e
topology: v6e:2x2x1
jax: 0.10.0
libtpu: 0.0.40
codegen_flags: <defaults>
</compile_context>

<pallas_src>
import functools

import jax
import jax.numpy as jnp
from jax.experimental import pallas as pl
from jax.experimental.pallas import tpu as pltpu

# Logical shapes (consistent with the forward pass); DP is the lane-padded
# feature dim, R the flattened row count, VEXT the extra lane tile holding the
# folded-in value head.
B, T, D, V = 2, 8, 32, 128
DP = 128
R = B * T
VEXT = 128


def actor_critic_kernel(inv_t_ref, next_tok_ref, mask_ref, x_ref,
                        w1_ref, b1_ref, wcomb_ref,
                        logits_ref, aux_ref):
    """Single-step kernel over all B*T rows.

    inv_t_ref    : SMEM (1,) f32   1 / temperature
    next_tok_ref : [R, 1] int32    token ids shifted left by one
    mask_ref     : [R, 1] f32      attention mask shifted left by one
    x_ref        : [R, DP] f32     embedded tokens (feature dim zero-padded)
    w1_ref, b1_ref : [DP, DP], [1, DP]
    wcomb_ref    : [DP, V + VEXT]  LM head in cols [0:V], value head in col V
    logits_ref   : [R, V] f32      temperature-scaled logits
    aux_ref      : [R, 128] f32    lane 0 = masked next-token logprob,
                                   lane 1 = value, other lanes 0
    """
    n_rows, vocab = logits_ref.shape
    inv_t = inv_t_ref[0]

    x = x_ref[...]                                             # [R, DP]
    h = jnp.maximum(
        jnp.dot(x, w1_ref[...], preferred_element_type=jnp.float32)
        + b1_ref[...],
        0.0)                                                   # [R, DP]

    # One MXU pass covers both the LM head and the folded-in value head.
    raw = jnp.dot(h, wcomb_ref[...],
                  preferred_element_type=jnp.float32)          # [R, V+VEXT]
    logits = raw[:, :vocab] * inv_t                            # [R, V]
    values = raw[:, vocab:vocab + 1]                           # [R, 1]
    logits_ref[...] = logits

    # Numerically stable logsumexp (row-wise).
    m = jnp.max(logits, axis=-1, keepdims=True)
    lse = jnp.log(jnp.sum(jnp.exp(logits - m), axis=-1, keepdims=True)) + m

    # Next-token gather without materializing the full [R, V] log-softmax:
    # pick the scaled logit with a one-hot reduce, subtract lse once per row.
    vocab_ids = jax.lax.broadcasted_iota(jnp.int32, (n_rows, vocab), 1)
    onehot = (vocab_ids == next_tok_ref[...]).astype(jnp.float32)
    picked = jnp.sum(logits * onehot, axis=-1, keepdims=True)  # [R, 1]
    tok_lp = (picked - lse) * mask_ref[...]                    # [R, 1]

    # Lane-dense aux slab: one full unmasked [R, 128] store.
    lane = jax.lax.broadcasted_iota(jnp.int32, (n_rows, aux_ref.shape[-1]), 1)
    aux_ref[...] = (jnp.where(lane == 0, tok_lp, 0.0)
                    + jnp.where(lane == 1, values, 0.0))


def make_params(key):
    """Logical (unpadded) parameters, D = 32."""
    k1, k2, k3, k4, k5 = jax.random.split(key, 5)
    return dict(
        emb=jax.random.normal(k1, (V, D), jnp.float32) * 0.02,
        w1=jax.random.normal(k2, (D, D), jnp.float32) * 0.1,
        b1=jax.random.normal(k3, (1, D), jnp.float32) * 0.01,
        wlm=jax.random.normal(k4, (D, V), jnp.float32) * 0.1,
        wv=jax.random.normal(k5, (D, 1), jnp.float32) * 0.1,
    )


def pad_params(params):
    """Zero-pad the feature dim to DP and fold the value head into the LM head."""
    emb_p = jnp.zeros((V, DP), jnp.float32).at[:, :D].set(params["emb"])
    w1_p = jnp.zeros((DP, DP), jnp.float32).at[:D, :D].set(params["w1"])
    b1_p = jnp.zeros((1, DP), jnp.float32).at[:, :D].set(params["b1"])
    wcomb = jnp.zeros((DP, V + VEXT), jnp.float32)
    wcomb = wcomb.at[:D, :V].set(params["wlm"])
    wcomb = wcomb.at[:D, V].set(params["wv"][:, 0])
    return dict(emb=emb_p, w1=w1_p, b1=b1_p, wcomb=wcomb)


@jax.jit
def _run_pallas(padded, sequences, attention_mask, inv_temperature):
    # Glue outside the kernel: embedding gather and the "[:, 1:]" shift.
    nb = sequences.shape[0]
    x = jnp.take(padded["emb"], sequences.reshape(-1), axis=0)        # [R, DP]
    next_tok = jnp.concatenate(
        [sequences[:, 1:], jnp.zeros((nb, 1), jnp.int32)],
        axis=1).reshape(-1, 1)                                        # [R, 1]
    shifted_mask = jnp.concatenate(
        [attention_mask[:, 1:], jnp.zeros((nb, 1), attention_mask.dtype)],
        axis=1).astype(jnp.float32).reshape(-1, 1)                    # [R, 1]
    inv_t = jnp.asarray(inv_temperature, jnp.float32).reshape(1)

    logits_flat, aux = pl.pallas_call(
        actor_critic_kernel,
        out_shape=(
            jax.ShapeDtypeStruct((R, V), jnp.float32),
            jax.ShapeDtypeStruct((R, 128), jnp.float32),
        ),
        grid_spec=pltpu.PrefetchScalarGridSpec(
            num_scalar_prefetch=0,
            grid=(1,),
            in_specs=[
                pl.BlockSpec(memory_space=pltpu.MemorySpace.SMEM),    # 1/temperature
                pl.BlockSpec((R, 1), lambda i: (0, 0)),               # next_tok
                pl.BlockSpec((R, 1), lambda i: (0, 0)),               # shifted mask
                pl.BlockSpec((R, DP), lambda i: (0, 0)),              # x
                pl.BlockSpec((DP, DP), lambda i: (0, 0)),             # w1
                pl.BlockSpec((1, DP), lambda i: (0, 0)),              # b1
                pl.BlockSpec((DP, V + VEXT), lambda i: (0, 0)),       # wlm | wv
            ],
            out_specs=[
                pl.BlockSpec((R, V), lambda i: (0, 0)),
                pl.BlockSpec((R, 128), lambda i: (0, 0)),
            ],
        ),
        compiler_params=pltpu.CompilerParams(
            dimension_semantics=("arbitrary",)),
    )(inv_t, next_tok, shifted_mask, x, padded["w1"], padded["b1"],
      padded["wcomb"])

    logits_full = logits_flat.reshape(B, T, V)
    tok_lp = aux[:, 0].reshape(B, T)
    vals = aux[:, 1].reshape(B, T)
    # Reference slicing semantics (logits[:, :-1, :], values[:, :-1],
    # logprobs over sequences[:, 1:]).  At real vocab sizes the consumer
    # should take logits_full directly instead of paying this extra HBM copy.
    return dict(
        logits=logits_full[:, :-1, :],
        logprobs=tok_lp[:, :-1],
        values=vals[:, :-1],
    )


def actor_critic_forward(params, sequences, attention_mask,
                         temperature=1.0, mode=None):
    # In a real RL loop, pad_params would be computed once and cached.
    padded = pad_params(params)
    out = _run_pallas(padded, sequences, attention_mask, 1.0 / float(temperature))
    # non-LoRA dummy_loss branch of the reference (glue, not the hot path)
    dummy_loss = 0.0 * jnp.sum(jnp.stack([jnp.mean(v) for v in params.values()]))
    if mode is None:
        return out
    elif mode == "policy":
        return dict(logits=out["logits"], logprobs=out["logprobs"],
                    dummy_loss=dummy_loss)
    elif mode == "value":
        return dict(values=out["values"], dummy_loss=dummy_loss)
    else:
        raise ValueError(f"Unknown mode: {mode}")


def _reference(params, sequences, attention_mask, temperature):
    x = jnp.take(params["emb"], sequences, axis=0)
    h = jnp.maximum(x @ params["w1"] + params["b1"][0], 0.0)
    logits = (h @ params["wlm"]) / temperature
    logp = jax.nn.log_softmax(logits, axis=-1)
    next_tok = sequences[:, 1:]
    tok_lp = jnp.take_along_axis(logp[:, :-1], next_tok[..., None], axis=-1)[..., 0]
    tok_lp = tok_lp * attention_mask[:, 1:].astype(jnp.float32)
    vals = (h @ params["wv"])[..., 0]
    return dict(logits=logits[:, :-1], logprobs=tok_lp, values=vals[:, :-1])


if __name__ == "__main__":
    key = jax.random.PRNGKey(0)
    pkey, skey = jax.random.split(key)
    params = make_params(pkey)

    sequences = jax.random.randint(skey, (B, T), 0, V, dtype=jnp.int32)
    attention_mask = jnp.ones((B, T), dtype=jnp.int32)
    temperature = 0.7

    out = actor_critic_forward(params, sequences, attention_mask, temperature)
    jax.block_until_ready(out)

    ref = _reference(params, sequences, attention_mask, temperature)
    for k in ("logits", "logprobs", "values"):
        assert out[k].shape == ref[k].shape, (k, out[k].shape, ref[k].shape)
        assert jnp.allclose(out[k], ref[k], atol=1e-4, rtol=1e-4), k

    print("KERNEL_OK")
</pallas_src>

<mosaic_0001>
module attributes {stable_mosaic.version = 11 : i64} {
  func.func @actor_critic_kernel(%arg0: i32, %arg1: memref<1xf32, #tpu.memory_space<smem>>, %arg2: memref<16x1xi32, #tpu.memory_space<vmem>>, %arg3: memref<16x1xf32, #tpu.memory_space<vmem>>, %arg4: memref<16x128xf32, #tpu.memory_space<vmem>>, %arg5: memref<128x128xf32, #tpu.memory_space<vmem>>, %arg6: memref<1x128xf32, #tpu.memory_space<vmem>>, %arg7: memref<128x256xf32, #tpu.memory_space<vmem>>, %arg8: memref<16x128xf32, #tpu.memory_space<vmem>>, %arg9: memref<16x128xf32, #tpu.memory_space<vmem>>) attributes {dimension_semantics = [#tpu.dimension_semantics<arbitrary>], iteration_bounds = array<i64: 1>, scalar_prefetch = 0 : i64, scratch_operands = 0 : i64, tpu.core_type = #tpu.core_type<tc>, window_params = [{transform_indices = @transform_0, window_bounds = array<i64: 1>}, {pipeline_mode = #tpu.pipeline_mode<synchronous>, transform_indices = @transform_1, window_bounds = array<i64: 16, 1>}, {pipeline_mode = #tpu.pipeline_mode<synchronous>, transform_indices = @transform_2, window_bounds = array<i64: 16, 1>}, {pipeline_mode = #tpu.pipeline_mode<synchronous>, transform_indices = @transform_3, window_bounds = array<i64: 16, 128>}, {pipeline_mode = #tpu.pipeline_mode<synchronous>, transform_indices = @transform_4, window_bounds = array<i64: 128, 128>}, {pipeline_mode = #tpu.pipeline_mode<synchronous>, transform_indices = @transform_5, window_bounds = array<i64: 1, 128>}, {pipeline_mode = #tpu.pipeline_mode<synchronous>, transform_indices = @transform_6, window_bounds = array<i64: 128, 256>}, {pipeline_mode = #tpu.pipeline_mode<synchronous>, transform_indices = @transform_7, window_bounds = array<i64: 16, 128>}, {pipeline_mode = #tpu.pipeline_mode<synchronous>, transform_indices = @transform_8, window_bounds = array<i64: 16, 128>}]} {
    %c0 = arith.constant 0 : index
    %0 = memref.load %arg1[%c0] : memref<1xf32, #tpu.memory_space<smem>>
    %c0_0 = arith.constant 0 : index
    %c0_1 = arith.constant 0 : index
    %1 = vector.load %arg4[%c0_0, %c0_1] : memref<16x128xf32, #tpu.memory_space<vmem>>, vector<16x128xf32>
    %c0_2 = arith.constant 0 : index
    %c0_3 = arith.constant 0 : index
    %2 = vector.load %arg5[%c0_2, %c0_3] : memref<128x128xf32, #tpu.memory_space<vmem>>, vector<128x128xf32>
    %cst = arith.constant dense<0.000000e+00> : vector<16x128xf32>
    %3 = tpu.matmul %1, %2, %cst {dimension_numbers = #tpu.dot_dimension_numbers<[1], [0], [0], [1], [0, 0, 1, 1], [], []>} : vector<16x128xf32>, vector<128x128xf32>, vector<16x128xf32> -> vector<16x128xf32>
    %c0_4 = arith.constant 0 : index
    %c0_5 = arith.constant 0 : index
    %4 = vector.load %arg6[%c0_4, %c0_5] : memref<1x128xf32, #tpu.memory_space<vmem>>, vector<1x128xf32>
    %5 = vector.broadcast %4 : vector<1x128xf32> to vector<16x128xf32>
    %6 = arith.addf %3, %5 : vector<16x128xf32>
    %cst_6 = arith.constant 0.000000e+00 : f32
    %7 = vector.broadcast %cst_6 : f32 to vector<16x128xf32>
    %8 = arith.maximumf %6, %7 : vector<16x128xf32>
    %c0_7 = arith.constant 0 : index
    %c0_8 = arith.constant 0 : index
    %9 = vector.load %arg7[%c0_7, %c0_8] : memref<128x256xf32, #tpu.memory_space<vmem>>, vector<128x256xf32>
    %cst_9 = arith.constant dense<0.000000e+00> : vector<16x256xf32>
    %10 = tpu.matmul %8, %9, %cst_9 {dimension_numbers = #tpu.dot_dimension_numbers<[1], [0], [0], [1], [0, 0, 1, 1], [], []>} : vector<16x128xf32>, vector<128x256xf32>, vector<16x256xf32> -> vector<16x256xf32>
    %11 = vector.extract_strided_slice %10 {offsets = [0, 0], sizes = [16, 128], strides = [1, 1]} : vector<16x256xf32> to vector<16x128xf32>
    %12 = vector.broadcast %0 : f32 to vector<16x128xf32>
    %13 = arith.mulf %11, %12 : vector<16x128xf32>
    %14 = vector.extract_strided_slice %10 {offsets = [0, 128], sizes = [16, 1], strides = [1, 1]} : vector<16x256xf32> to vector<16x1xf32>
    %c0_10 = arith.constant 0 : index
    %c0_11 = arith.constant 0 : index
    %15 = vector.load %arg8[%c0_10, %c0_11] : memref<16x128xf32, #tpu.memory_space<vmem>>, vector<16x128xf32>
    tpu.vector_store %arg8[%c0_10, %c0_11], %13 {strides = array<i32>} : memref<16x128xf32, #tpu.memory_space<vmem>>, vector<16x128xf32>,
    %cst_12 = arith.constant dense<0xFF800000> : vector<16xf32>
    %16 = vector.multi_reduction <maximumf>, %13, %cst_12 [1] : vector<16x128xf32> to vector<16xf32>
    %17 = vector.shape_cast %16 : vector<16xf32> to vector<16x1xf32>
    %18 = vector.broadcast %17 : vector<16x1xf32> to vector<16x128xf32>
    %19 = arith.subf %13, %18 : vector<16x128xf32>
    %20 = math.exp %19 : vector<16x128xf32>
    %cst_13 = arith.constant dense<0.000000e+00> : vector<16xf32>
    %21 = vector.multi_reduction <add>, %20, %cst_13 [1] : vector<16x128xf32> to vector<16xf32>
    %22 = vector.shape_cast %21 : vector<16xf32> to vector<16x1xf32>
    %23 = math.log %22 : vector<16x1xf32>
    %24 = arith.addf %23, %17 : vector<16x1xf32>
    %25 = tpu.iota {dimensions = array<i32: 1>} : vector<16x128xi32>
    %c0_14 = arith.constant 0 : index
    %c0_15 = arith.constant 0 : index
    %26 = vector.load %arg2[%c0_14, %c0_15] : memref<16x1xi32, #tpu.memory_space<vmem>>, vector<16x1xi32>
    %27 = vector.broadcast %26 : vector<16x1xi32> to vector<16x128xi32>
    %28 = arith.cmpi eq, %25, %27 : vector<16x128xi32>
    %29 = arith.extui %28 : vector<16x128xi1> to vector<16x128xi32>
    %30 = arith.sitofp %29 : vector<16x128xi32> to vector<16x128xf32>
    %31 = arith.mulf %13, %30 : vector<16x128xf32>
    %cst_16 = arith.constant dense<0.000000e+00> : vector<16xf32>
    %32 = vector.multi_reduction <add>, %31, %cst_16 [1] : vector<16x128xf32> to vector<16xf32>
    %33 = vector.shape_cast %32 : vector<16xf32> to vector<16x1xf32>
    %34 = arith.subf %33, %24 : vector<16x1xf32>
    %c0_17 = arith.constant 0 : index
    %c0_18 = arith.constant 0 : index
    %35 = vector.load %arg3[%c0_17, %c0_18] : memref<16x1xf32, #tpu.memory_space<vmem>>, vector<16x1xf32>
    %36 = arith.mulf %34, %35 : vector<16x1xf32>
    %37 = tpu.iota {dimensions = array<i32: 1>} : vector<16x128xi32>
    %c0_i32 = arith.constant 0 : i32
    %38 = vector.broadcast %c0_i32 : i32 to vector<16x128xi32>
    %39 = arith.cmpi eq, %37, %38 : vector<16x128xi32>
    %cst_19 = arith.constant 0.000000e+00 : f32
    %40 = vector.shape_cast %36 : vector<16x1xf32> to vector<16x1xf32>
    %41 = vector.broadcast %40 : vector<16x1xf32> to vector<16x128xf32>
    %42 = vector.broadcast %cst_19 : f32 to vector<16x128xf32>
    %43 = arith.select %39, %41, %42 : vector<16x128xi1>, vector<16x128xf32>
    %c1_i32 = arith.constant 1 : i32
    %44 = vector.broadcast %c1_i32 : i32 to vector<16x128xi32>
    %45 = arith.cmpi eq, %37, %44 : vector<16x128xi32>
    %cst_20 = arith.constant 0.000000e+00 : f32
    %46 = vector.shape_cast %14 : vector<16x1xf32> to vector<16x1xf32>
    %47 = vector.broadcast %46 : vector<16x1xf32> to vector<16x128xf32>
    %48 = vector.broadcast %cst_20 : f32 to vector<16x128xf32>
    %49 = arith.select %45, %47, %48 : vector<16x128xi1>, vector<16x128xf32>
    %50 = arith.addf %43, %49 : vector<16x128xf32>
    %c0_21 = arith.constant 0 : index
    %c0_22 = arith.constant 0 : index
    %51 = vector.load %arg9[%c0_21, %c0_22] : memref<16x128xf32, #tpu.memory_space<vmem>>, vector<16x128xf32>
    tpu.vector_store %arg9[%c0_21, %c0_22], %50 {strides = array<i32>} : memref<16x128xf32, #tpu.memory_space<vmem>>, vector<16x128xf32>,
    return
  }
  func.func @transform_0(%arg0: i32) -> i32 {
    %c0_i32 = arith.constant 0 : i32
    %c0_i32_0 = arith.constant 0 : i32
    return %c0_i32 : i32
  }
  func.func @transform_1(%arg0: i32) -> (i32, i32) {
    %c0_i32 = arith.constant 0 : i32
    %c0_i32_0 = arith.constant 0 : i32
    %c0_i32_1 = arith.constant 0 : i32
    return %c0_i32, %c0_i32_0 : i32, i32
  }
  func.func @transform_2(%arg0: i32) -> (i32, i32) {
    %c0_i32 = arith.constant 0 : i32
    %c0_i32_0 = arith.constant 0 : i32
    %c0_i32_1 = arith.constant 0 : i32
    return %c0_i32, %c0_i32_0 : i32, i32
  }
  func.func @transform_3(%arg0: i32) -> (i32, i32) {
    %c0_i32 = arith.constant 0 : i32
    %c0_i32_0 = arith.constant 0 : i32
    %c0_i32_1 = arith.constant 0 : i32
    return %c0_i32, %c0_i32_0 : i32, i32
  }
  func.func @transform_4(%arg0: i32) -> (i32, i32) {
    %c0_i32 = arith.constant 0 : i32
    %c0_i32_0 = arith.constant 0 : i32
    %c0_i32_1 = arith.constant 0 : i32
    return %c0_i32, %c0_i32_0 : i32, i32
  }
  func.func @transform_5(%arg0: i32) -> (i32, i32) {
    %c0_i32 = arith.constant 0 : i32
    %c0_i32_0 = arith.constant 0 : i32
    %c0_i32_1 = arith.constant 0 : i32
    return %c0_i32, %c0_i32_0 : i32, i32
  }
  func.func @transform_6(%arg0: i32) -> (i32, i32) {
    %c0_i32 = arith.constant 0 : i32
    %c0_i32_0 = arith.constant 0 : i32
    %c0_i32_1 = arith.constant 0 : i32
    return %c0_i32, %c0_i32_0 : i32, i32
  }
  func.func @transform_7(%arg0: i32) -> (i32, i32) {
    %c0_i32 = arith.constant 0 : i32
    %c0_i32_0 = arith.constant 0 : i32
    %c0_i32_1 = arith.constant 0 : i32
    return %c0_i32, %c0_i32_0 : i32, i32
  }
  func.func @transform_8(%arg0: i32) -> (i32, i32) {
    %c0_i32 = arith.constant 0 : i32
    %c0_i32_0 = arith.constant 0 : i32
    %c0_i32_1 = arith.constant 0 : i32
    return %c0_i32, %c0_i32_0 : i32, i32
  }
}

</mosaic_0001>

<llo_original>
// kernel: squeeze.3
$region0: #{squeeze.3}
  %s0 = inlined_call_operand.vmem [shape: f32[16], index: 0, kind: input, shape index: {}]
  %s1 = inlined_call_operand.hbm [shape: f32[2,8], index: 1, kind: output, shape index: {}]
  $region1: #{squeeze.3} parent=0
    #allocation0 [shape = 'u8[1024]{0}', space=vmem, size = 0x400, scoped, tag = 'operand span for operand 1']
    #allocation1 [shape = 's32[1]{0}', space=sflag, size = 0x4, scoped, tag = 'scoped memory for squeeze.3']
    #allocation2 [shape = 'u8[4096]{0}', space=vmem, size = 0x1000, scoped, tag = 'scoped mem for output reshape']
    #allocation3 [shape = 'u8[4096]{0}', space=vmem, size = 0x1000, scoped, tag = 'scoped mem for input reshape']
    %2 = vsyncpa [#allocation1], 0
    %s4 = sshll.u32 1, 1
    %s5 = ssub.s32 %s4, 1
    %v6 = vld [vmem:[%s0] sm:%s5]
    %7 = vst [vmem:[#allocation3] sm:%s5] %v6
    %v8 = vld [vmem:[#allocation3] sm:$0x1]
    %vm9 = vcmask 64512
    %10 = vst.msk [vmem:[#allocation2] sm:$0x1] %vm9, %v8
    %v11 = vld [vmem:[#allocation3] sm:$0x1]
    %12 = vrot.lane.b32.xlu0 %v11, 120
    %v13 = vpop.permute.xlu0 %12
    %vm14 = vcmask 64512
    %s15 = scalar_lea.vmem [#allocation2], 1
    %16 = vst.msk [vmem:[%s15] sm:$0x1] %vm14, %v13
    %s18 = sshll.u32 1, 2
    %s19 = ssub.s32 %s18, 1
    %v21 = vld [vmem:[#allocation2] sm:%s19]
    %s22 = sshll.u32 1, 2
    %s23 = ssub.s32 %s22, 1
    %24 = vst [vmem:[#allocation0] sm:%s23] %v21
    %s26 = ssub.s32 32, 32
    %27 = vsyncadd [#allocation1], %s26
    %s29 = sshll.u32 [#allocation0], 4
    %s30 = int_to_ptr.vmem [resolvable:$true] %s29
    %32 = dma.vmem_to_hbm [thread:$0]  %s30, 32, %s1, [#allocation1]
    %33 = dma.done [#allocation1], 32
    %34 = vsyncpa [#allocation1], 1

// kernel: _run_pallas.1
$region0: #{_run_pallas.1}
  #allocation0 [shape = 'u32[]', space=smem, size = 0x4, offset = 0x4, fixed_abs, tag = 'smem constant byte address 0x4 - core index']
  #allocation1 [shape = 'u32[144,128]{1,0:T(1,128)}', space=vmem, size = 0x12000, scoped, tag = 'internal scratch']
  #allocation2 [shape = 'f32[1]{0:T(128)S(6)}', space=smem, size = 0x200, scoped, tag = 'scoped memory for _run_pallas.1']
  %s0 = inlined_call_operand.<no memory space> [shape: f32[1], index: 0, kind: input, shape index: {}]
  %s1 = inlined_call_operand.vmem [shape: s32[16,1], index: 1, kind: input, shape index: {}]
  %s2 = inlined_call_operand.vmem [shape: f32[16,1], index: 2, kind: input, shape index: {}]
  %s3 = inlined_call_operand.vmem [shape: f32[16,128], index: 3, kind: input, shape index: {}]
  %s4 = inlined_call_operand.hbm [shape: f32[128,128], index: 4, kind: input, shape index: {}]
  %s5 = inlined_call_operand.vmem [shape: f32[1,128], index: 5, kind: input, shape index: {}]
  %s6 = inlined_call_operand.vmem [shape: f32[128,256], index: 6, kind: input, shape index: {}]
  %s7 = inlined_call_operand.vmem [shape: f32[16,128], index: 7, kind: output, shape index: {0}]
  %s8 = inlined_call_operand.vmem [shape: f32[16,128], index: 8, kind: output, shape index: {1}]
  %9 = xla_tuple %s7, %s8
  %s10 = sld [smem:[#allocation0]]
  $region50: #{_run_pallas.1} parent=0
    _
  %s12 = ssub.s32 1, %s10
  %s13 = scalar_select 0, %s12, %s10
  %14 = sst [smem:[#allocation2]] %s0
  $region1: #{_run_pallas.1} parent=0
    #allocation3 [shape = 'u8[65536]{0}', space=vmem, size = 0x10000, scoped, tag = 'input window, operand 4, single buffered']
    #allocation4 [shape = 's32[1]{0}', space=sflag, size = 0x4, scoped, tag = 'scoped memory for _run_pallas.1']
    %15 = vsyncpa [#allocation4], 0
    // Predicated region
    $region2: #{_run_pallas.1} parent=1 // pred_check
      _
    $region3: #{_run_pallas.1} parent=1 // pred_check_branch
      %17 = sbr.rel (0) target = $region5
    $region4: #{_run_pallas.1} parent=1 // pred_region
      _
    $region5: #{_run_pallas.1} parent=1 // pred_fallthru
      _
    // Predicated region
    $region6: #{_run_pallas.1} parent=1 // pred_check
      _
    $region7: #{_run_pallas.1} parent=1 // pred_check_branch
      %19 = sbr.rel (0) target = $region9
    $region8: #{_run_pallas.1} parent=1 // pred_region
      _
    $region9: #{_run_pallas.1} parent=1 // pred_fallthru
      _
    // Predicated region
    $region10: #{_run_pallas.1} parent=1 // pred_check
      _
    $region11: #{_run_pallas.1} parent=1 // pred_check_branch
      %21 = sbr.rel (0) target = $region13
    $region12: #{_run_pallas.1} parent=1 // pred_region
      _
    $region13: #{_run_pallas.1} parent=1 // pred_fallthru
      _
    // Predicated region
    $region14: #{_run_pallas.1} parent=1 // pred_check
      _
    $region15: #{_run_pallas.1} parent=1 // pred_check_branch
      %23 = sbr.rel (0) target = $region17
    $region16: #{_run_pallas.1} parent=1 // pred_region
      _
    $region17: #{_run_pallas.1} parent=1 // pred_fallthru
      _
    // Predicated region
    $region18: #{_run_pallas.1} parent=1 // pred_check
      _
    $region19: #{_run_pallas.1} parent=1 // pred_check_branch
      %25 = sbr.rel (0) target = $region21
    $region20: #{_run_pallas.1} parent=1 // pred_region
      %s27 = ssub.s32 2048, 2048
      %28 = vsyncadd [#allocation4], %s27
      %s29 = sshll.u32 [#allocation3], 4
      %s30 = int_to_ptr.vmem [resolvable:$true] %s29
      %35 = dma.hbm_to_vmem [thread:$0]  %s4, 2048, %s30, [#allocation4], 128, 128, 8
    $region21: #{_run_pallas.1} parent=1 // pred_fallthru
      _
    // Predicated region
    $region22: #{_run_pallas.1} parent=1 // pred_check
      _
    $region23: #{_run_pallas.1} parent=1 // pred_check_branch
      %37 = sbr.rel (0) target = $region25
    $region24: #{_run_pallas.1} parent=1 // pred_region
      _
    $region25: #{_run_pallas.1} parent=1 // pred_fallthru
      _
    // Predicated region
    $region26: #{_run_pallas.1} parent=1 // pred_check
      _
    $region27: #{_run_pallas.1} parent=1 // pred_check_branch
      %39 = sbr.rel (0) target = $region29
    $region28: #{_run_pallas.1} parent=1 // pred_region
      _
    $region29: #{_run_pallas.1} parent=1 // pred_fallthru
      _
    // Predicated region
    $region30: #{_run_pallas.1} parent=1 // pred_check
      _
    $region31: #{_run_pallas.1} parent=1 // pred_check_branch
      %41 = sbr.rel (0) target = $region33
    $region32: #{_run_pallas.1} parent=1 // pred_region
      %42 = dma.done [#allocation4], 2048
    $region33: #{_run_pallas.1} parent=1 // pred_fallthru
      _
    %s43 = sld [smem:[#allocation2]]
    %v44 = vld [vmem:[%s3] sm:$0xff]
    %v45 = vld [vmem:[%s3 + $0x8] sm:$0xff]
    %v46 = vld [vmem:[#allocation3] sm:$0xff]
    %v47 = vld [vmem:[#allocation3 + $0x8] sm:$0xff]
    %v48 = vld [vmem:[#allocation3 + $0x10] sm:$0xff]
    %v49 = vld [vmem:[#allocation3 + $0x18] sm:$0xff]
    %v50 = vld [vmem:[#allocation3 + $0x20] sm:$0xff]
    %v51 = vld [vmem:[#allocation3 + $0x28] sm:$0xff]
    %v52 = vld [vmem:[#allocation3 + $0x30] sm:$0xff]
    %v53 = vld [vmem:[#allocation3 + $0x38] sm:$0xff]
    %v54 = vld [vmem:[#allocation3 + $0x40] sm:$0xff]
    %v55 = vld [vmem:[#allocation3 + $0x48] sm:$0xff]
    %v56 = vld [vmem:[#allocation3 + $0x50] sm:$0xff]
    %v57 = vld [vmem:[#allocation3 + $0x58] sm:$0xff]
    %v58 = vld [vmem:[#allocation3 + $0x60] sm:$0xff]
    %v59 = vld [vmem:[#allocation3 + $0x68] sm:$0xff]
    %v60 = vld [vmem:[#allocation3 + $0x70] sm:$0xff]
    %v61 = vld [vmem:[#allocation3 + $0x78] sm:$0xff]
    %v62 = vld [vmem:[%s5] sm:$0x1]
    %v64 = vlaneseq
    %v65 = vshrl.u32 %v64, 7
    %v66 = vsub.s32 0, %v65
    %v67 = vrot.slane %v62, %v66
    %69 = vmatprep.subr.mxu0 0.0
    %70 = vmatpush1.msra.mxu0 %v61
    %71 = vmatprep.subr.mxu0 0.0
    %72 = vmatpush1.msra.mxu0 %v60
    %73 = vmatprep.subr.mxu0 0.0
    %74 = vmatpush1.msra.mxu0 %v59
    %75 = vmatprep.subr.mxu0 0.0
    %76 = vmatpush1.msra.mxu0 %v58
    %77 = vmatprep.subr.mxu0 0.0
    %78 = vmatpush1.msra.mxu0 %v57
    %79 = vmatprep.subr.mxu0 0.0
    %80 = vmatpush1.msra.mxu0 %v56
    %81 = vmatprep.subr.mxu0 0.0
    %82 = vmatpush1.msra.mxu0 %v55
    %83 = vmatprep.subr.mxu0 0.0
    %84 = vmatpush1.msra.mxu0 %v54
    %85 = vmatprep.subr.mxu0 0.0
    %86 = vmatpush1.msra.mxu0 %v53
    %87 = vmatprep.subr.mxu0 0.0
    %88 = vmatpush1.msra.mxu0 %v52
    %89 = vmatprep.subr.mxu0 0.0
    %90 = vmatpush1.msra.mxu0 %v51
    %91 = vmatprep.subr.mxu0 0.0
    %92 = vmatpush1.msra.mxu0 %v50
    %93 = vmatprep.subr.mxu0 0.0
    %94 = vmatpush1.msra.mxu0 %v49
    %95 = vmatprep.subr.mxu0 0.0
    %96 = vmatpush1.msra.mxu0 %v48
    %97 = vmatprep.subr.mxu0 0.0
    %98 = vmatpush1.msra.mxu0 %v47
    %99 = vmatprep.subr.mxu0 0.0
    %100 = vmatpush1.msra.mxu0 %v46
    %101 = vmatprep.subr.mxu0 0.0
    %102 = vmatpush2.msra.mxu0 0.0
    %103 = vmatprep.subr.mxu0 0.0
    %104 = vmatpush2.msra.mxu0 0.0
    %105 = vmatprep.subr.mxu0 0.0
    %106 = vmatpush2.msra.mxu0 0.0
    %107 = vmatprep.subr.mxu0 0.0
    %108 = vmatpush2.msra.mxu0 0.0
    %109 = vmatprep.subr.mxu0 0.0
    %110 = vmatpush2.msra.mxu0 0.0
    %111 = vmatprep.subr.mxu0 0.0
    %112 = vmatpush2.msra.mxu0 0.0
    %113 = vmatprep.subr.mxu0 0.0
    %114 = vmatpush2.msra.mxu0 0.0
    %115 = vmatprep.subr.mxu0 0.0
    %116 = vmatpush2.msra.mxu0 0.0
    %117 = vmatprep.subr.mxu0 0.0
    %118 = vmatpush2.msra.mxu0 0.0
    %119 = vmatprep.subr.mxu0 0.0
    %120 = vmatpush2.msra.mxu0 0.0
    %121 = vmatprep.subr.mxu0 0.0
    %122 = vmatpush2.msra.mxu0 0.0
    %123 = vmatprep.subr.mxu0 0.0
    %124 = vmatpush2.msra.mxu0 0.0
    %125 = vmatprep.subr.mxu0 0.0
    %126 = vmatpush2.msra.mxu0 0.0
    %127 = vmatprep.subr.mxu0 0.0
    %128 = vmatpush2.msra.mxu0 0.0
    %129 = vmatprep.subr.mxu0 0.0
    %130 = vmatpush2.msra.mxu0 0.0
    %131 = vmatprep.subr.mxu0 0.0
    %132 = vmatpush2.msra.mxu0 0.0
    %133 = vmatprep.mubr.f32.mxu0 0.0
    %134 = vmatmul.mubr.f32.gmra.mxu0 %v44
    %v135 = vpop.f32.mrf.mxu0
    %v136 = vadd.f32 %v67, %v135
    %v137 = vpop.f32.mrf.mxu0
    %138 = vmatprep.mubr.f32.mxu0 0.0
    %139 = vmatmul.mubr.f32.gmra.mxu0 %v45
    %v140 = vpop.f32.mrf.mxu0
    %v141 = vadd.f32 %v67, %v140
    %v142 = vpop.f32.mrf.mxu0
    %143 = vdwg.mxu0
    %v144 = vmax.f32 %v136, 0.0
    %v145 = vmax.f32 %v141, 0.0
    %v146 = vld [vmem:[%s6] sm:$0xff]
    %v147 = vld [vmem:[%s6 + $0x8] sm:$0xff]
    %v148 = vld [vmem:[%s6 + $0x10] sm:$0xff]
    %v149 = vld [vmem:[%s6 + $0x18] sm:$0xff]
    %v150 = vld [vmem:[%s6 + $0x20] sm:$0xff]
    %v151 = vld [vmem:[%s6 + $0x28] sm:$0xff]
    %v152 = vld [vmem:[%s6 + $0x30] sm:$0xff]
    %v153 = vld [vmem:[%s6 + $0x38] sm:$0xff]
    %v154 = vld [vmem:[%s6 + $0x40] sm:$0xff]
    %v155 = vld [vmem:[%s6 + $0x48] sm:$0xff]
    %v156 = vld [vmem:[%s6 + $0x50] sm:$0xff]
    %v157 = vld [vmem:[%s6 + $0x58] sm:$0xff]
    %v158 = vld [vmem:[%s6 + $0x60] sm:$0xff]
    %v159 = vld [vmem:[%s6 + $0x68] sm:$0xff]
    %v160 = vld [vmem:[%s6 + $0x70] sm:$0xff]
    %v161 = vld [vmem:[%s6 + $0x78] sm:$0xff]
    %v162 = vld [vmem:[%s6 + $0x80] sm:$0xff]
    %v163 = vld [vmem:[%s6 + $0x88] sm:$0xff]
    %v164 = vld [vmem:[%s6 + $0x90] sm:$0xff]
    %v165 = vld [vmem:[%s6 + $0x98] sm:$0xff]
    %v166 = vld [vmem:[%s6 + $0xa0] sm:$0xff]
    %v167 = vld [vmem:[%s6 + $0xa8] sm:$0xff]
    %v168 = vld [vmem:[%s6 + $0xb0] sm:$0xff]
    %v169 = vld [vmem:[%s6 + $0xb8] sm:$0xff]
    %v170 = vld [vmem:[%s6 + $0xc0] sm:$0xff]
    %v171 = vld [vmem:[%s6 + $0xc8] sm:$0xff]
    %v172 = vld [vmem:[%s6 + $0xd0] sm:$0xff]
    %v173 = vld [vmem:[%s6 + $0xd8] sm:$0xff]
    %v174 = vld [vmem:[%s6 + $0xe0] sm:$0xff]
    %v175 = vld [vmem:[%s6 + $0xe8] sm:$0xff]
    %v176 = vld [vmem:[%s6 + $0xf0] sm:$0xff]
    %v177 = vld [vmem:[%s6 + $0xf8] sm:$0xff]
    %178 = vmatprep.subr.mxu0 %v177
    %179 = vmatpush1.msra.mxu0 %v176
    %180 = vmatprep.subr.mxu0 %v175
    %181 = vmatpush1.msra.mxu0 %v174
    %182 = vmatprep.subr.mxu0 %v173
    %183 = vmatpush1.msra.mxu0 %v172
    %184 = vmatprep.subr.mxu0 %v171
    %185 = vmatpush1.msra.mxu0 %v170
    %186 = vmatprep.subr.mxu0 %v169
    %187 = vmatpush1.msra.mxu0 %v168
    %188 = vmatprep.subr.mxu0 %v167
    %189 = vmatpush1.msra.mxu0 %v166
    %190 = vmatprep.subr.mxu0 %v165
    %191 = vmatpush1.msra.mxu0 %v164
    %192 = vmatprep.subr.mxu0 %v163
    %193 = vmatpush1.msra.mxu0 %v162
    %194 = vmatprep.subr.mxu0 %v161
    %195 = vmatpush1.msra.mxu0 %v160
    %196 = vmatprep.subr.mxu0 %v159
    %197 = vmatpush1.msra.mxu0 %v158
    %198 = vmatprep.subr.mxu0 %v157
    %199 = vmatpush1.msra.mxu0 %v156
    %200 = vmatprep.subr.mxu0 %v155
    %201 = vmatpush1.msra.mxu0 %v154
    %202 = vmatprep.subr.mxu0 %v153
    %203 = vmatpush1.msra.mxu0 %v152
    %204 = vmatprep.subr.mxu0 %v151
    %205 = vmatpush1.msra.mxu0 %v150
    %206 = vmatprep.subr.mxu0 %v149
    %207 = vmatpush1.msra.mxu0 %v148
    %208 = vmatprep.subr.mxu0 %v147
    %209 = vmatpush1.msra.mxu0 %v146
    %210 = vmatprep.subr.mxu0 0.0
    %211 = vmatpush2.msra.mxu0 0.0
    %212 = vmatprep.subr.mxu0 0.0
    %213 = vmatpush2.msra.mxu0 0.0
    %214 = vmatprep.subr.mxu0 0.0
    %215 = vmatpush2.msra.mxu0 0.0
    %216 = vmatprep.subr.mxu0 0.0
    %217 = vmatpush2.msra.mxu0 0.0
    %218 = vmatprep.subr.mxu0 0.0
    %219 = vmatpush2.msra.mxu0 0.0
    %220 = vmatprep.subr.mxu0 0.0
    %221 = vmatpush2.msra.mxu0 0.0
    %222 = vmatprep.subr.mxu0 0.0
    %223 = vmatpush2.msra.mxu0 0.0
    %224 = vmatprep.subr.mxu0 0.0
    %225 = vmatpush2.msra.mxu0 0.0
    %226 = vmatprep.subr.mxu0 0.0
    %227 = vmatpush2.msra.mxu0 0.0
    %228 = vmatprep.subr.mxu0 0.0
    %229 = vmatpush2.msra.mxu0 0.0
    %230 = vmatprep.subr.mxu0 0.0
    %231 = vmatpush2.msra.mxu0 0.0
    %232 = vmatprep.subr.mxu0 0.0
    %233 = vmatpush2.msra.mxu0 0.0
    %234 = vmatprep.subr.mxu0 0.0
    %235 = vmatpush2.msra.mxu0 0.0
    %236 = vmatprep.subr.mxu0 0.0
    %237 = vmatpush2.msra.mxu0 0.0
    %238 = vmatprep.subr.mxu0 0.0
    %239 = vmatpush2.msra.mxu0 0.0
    %240 = vmatprep.subr.mxu0 0.0
    %241 = vmatpush2.msra.mxu0 0.0
    %242 = vmatprep.mubr.f32.mxu0 0.0
    %243 = vmatmul.mubr.f32.gmra.mxu0 %v144
    %v244 = vpop.f32.mrf.mxu0
    %v245 = vadd.f32 0.0, %v244
    %v246 = vpop.f32.mrf.mxu0
    %v247 = vadd.f32 0.0, %v246
    %248 = vmatprep.mubr.f32.mxu0 0.0
    %249 = vmatmul.mubr.f32.gmra.mxu0 %v145
    %v250 = vpop.f32.mrf.mxu0
    %v251 = vadd.f32 0.0, %v250
    %v252 = vpop.f32.mrf.mxu0
    %v253 = vadd.f32 0.0, %v252
    %254 = vdwg.mxu0
    %v255 = vstv %s43
    %v256 = vmul.f32 %v245, %v255
    %v257 = vmul.f32 %v251, %v255
    %258 = vst [vmem:[%s7] sm:$0xff] %v256
    %259 = vst [vmem:[%s7 + $0x8] sm:$0xff] %v257
    %260 = vmax.xlane.f32.xlu0 %v256
    %v261 = vpop.xlane.xlu0 %260
    %262 = vmax.xlane.f32.xlu0 %v257
    %v263 = vpop.xlane.xlu0 %262
    %v264 = vsub.f32 %v256, %v261
    %v265 = vsub.f32 %v257, %v263
    %v266 = vmul.f32 %v264, 1.442695
    %v267 = vpow.pop %v266
    %v268 = vmul.f32 %v265, 1.442695
    %v269 = vpow.pop %v268
    %270 = vadd.xlane.f32.xlu0 %v267
    %v271 = vpop.xlane.xlu0 %270
    %272 = vadd.xlane.f32.xlu0 %v269
    %v273 = vpop.xlane.xlu0 %272
    %v274 = vlog2.pop %v271
    %v275 = vmul.f32 %v274, 0.6931472
    %v276 = vlog2.pop %v273
    %v277 = vmul.f32 %v276, 0.6931472
    %v278 = vadd.f32 %v275, %v261
    %v279 = vadd.f32 %v277, %v263
    %v280 = vlaneseq
    %v281 = vand.u32 %v280, 127
    %v282 = vld [vmem:[%s1] sm:$0xff]
    %v283 = vld [vmem:[%s1 + $0x8] sm:$0xff]
    %284 = vset.pattern.permute.xlu0 0
    %285 = vperm.xlu0 %284, %v282
    %v286 = vpop.permute.xlu0 %285
    %287 = vset.pattern.permute.xlu0 0
    %288 = vperm.xlu0 %287, %v283
    %v289 = vpop.permute.xlu0 %288
    %vm290 = vcmp.eq.s32.totalorder %v281, %v286
    %vm291 = vcmp.eq.s32.totalorder %v281, %v289
    %v292 = vsel %vm290, 1, 0
    %v293 = vsel %vm291, 1, 0
    %v294 = vcvt.s32.f32 %v292
    %v295 = vcvt.s32.f32 %v293
    %v296 = vmul.f32 %v256, %v294
    %v297 = vmul.f32 %v257, %v295
    %298 = vadd.xlane.f32.xlu0 %v296
    %v299 = vpop.xlane.xlu0 %298
    %300 = vadd.xlane.f32.xlu0 %v297
    %v301 = vpop.xlane.xlu0 %300
    %v302 = vsub.f32 %v299, %v278
    %v303 = vsub.f32 %v301, %v279
    %v304 = vld [vmem:[%s2] sm:$0xff]
    %v305 = vld [vmem:[%s2 + $0x8] sm:$0xff]
    %v306 = vmul.f32 %v302, %v304
    %v307 = vmul.f32 %v303, %v305
    %vm308 = vcmp.eq.s32.totalorder %v281, 0
    %310 = vset.pattern.permute.xlu0 0
    %311 = vperm.xlu0 %310, %v306
    %v312 = vpop.permute.xlu0 %311
    %315 = vset.pattern.permute.xlu0 0
    %316 = vperm.xlu0 %315, %v307
    %v317 = vpop.permute.xlu0 %316
    %v319 = vsel %vm308, %v312, 0.0
    %v320 = vsel %vm308, %v317, 0.0
    %vm321 = vcmp.eq.s32.totalorder %v281, 1
    %323 = vset.pattern.permute.xlu0 0
    %324 = vperm.xlu0 %323, %v247
    %v325 = vpop.permute.xlu0 %324
    %328 = vset.pattern.permute.xlu0 0
    %329 = vperm.xlu0 %328, %v253
    %v330 = vpop.permute.xlu0 %329
    %v332 = vsel %vm321, %v325, 0.0
    %v333 = vsel %vm321, %v330, 0.0
    %v334 = vadd.f32 %v319, %v332
    %v335 = vadd.f32 %v320, %v333
    %336 = vst [vmem:[%s8] sm:$0xff] %v334
    %337 = vst [vmem:[%s8 + $0x8] sm:$0xff] %v335
    // Predicated region
    $region34: #{_run_pallas.1} parent=1 // pred_check
      _
    $region35: #{_run_pallas.1} parent=1 // pred_check_branch
      %339 = sbr.rel (0) target = $region37
    $region36: #{_run_pallas.1} parent=1 // pred_region
      _
    $region37: #{_run_pallas.1} parent=1 // pred_fallthru
      _
    // Predicated region
    $region38: #{_run_pallas.1} parent=1 // pred_check
      _
    $region39: #{_run_pallas.1} parent=1 // pred_check_branch
      %341 = sbr.rel (0) target = $region41
    $region40: #{_run_pallas.1} parent=1 // pred_region
      _
    $region41: #{_run_pallas.1} parent=1 // pred_fallthru
      _
    // Predicated region
    $region42: #{_run_pallas.1} parent=1 // pred_check
      _
    $region43: #{_run_pallas.1} parent=1 // pred_check_branch
      %343 = sbr.rel (0) target = $region45
    $region44: #{_run_pallas.1} parent=1 // pred_region
      _
    $region45: #{_run_pallas.1} parent=1 // pred_fallthru
      _
    // Predicated region
    $region46: #{_run_pallas.1} parent=1 // pred_check
      _
    $region47: #{_run_pallas.1} parent=1 // pred_check_branch
      %345 = sbr.rel (0) target = $region49
    $region48: #{_run_pallas.1} parent=1 // pred_region
      _
    $region49: #{_run_pallas.1} parent=1 // pred_fallthru
      _
    %346 = vsyncpa [#allocation4], 1

</llo_original>
